<compile_context>
chip_gen: v6e
topology: v6e:2x2x1
jax: 0.10.0
libtpu: 0.0.40
codegen_flags: <defaults>
</compile_context>

<pallas_src>
import functools

import jax
import jax.numpy as jnp
from jax.experimental import pallas as pl
from jax.experimental.pallas import tpu as pltpu

_SUBLANE = 8            # f32 sublane granularity (second-to-last dim)
_SPLIT_THRESHOLD = 256  # rows above which we force >= 2 grid steps (v7x megacore, DMA overlap)


def _round_up(x, m):
    return (x + m - 1) // m * m


def _cdiv(a, b):
    return -(-a // b)


def _actor_kernel(x_ref, w1_ref, b1_ref, w2_ref, b2_ref, w3_ref, b3_ref,
                  prob_ref):
    """Fused 3-layer MLP + softmax for one batch tile.

    Dot inputs are bf16 (weights pre-cast at init, activations cast here);
    accumulation, bias-add, ReLU and softmax are all f32.
    """
    x = x_ref[...].astype(jnp.bfloat16)

    # Layer 1: Linear(S, 32) + ReLU
    h1 = jnp.dot(x, w1_ref[...], preferred_element_type=jnp.float32)
    h1 = jnp.maximum(h1 + b1_ref[...], 0.0)

    # Layer 2: Linear(32, 64) + ReLU
    h2 = jnp.dot(h1.astype(jnp.bfloat16), w2_ref[...],
                 preferred_element_type=jnp.float32)
    h2 = jnp.maximum(h2 + b2_ref[...], 0.0)

    # Layer 3: Linear(64, A) -> logits
    logits = jnp.dot(h2.astype(jnp.bfloat16), w3_ref[...],
                     preferred_element_type=jnp.float32)
    logits = logits + b3_ref[...]

    # Numerically stable softmax over the true action axis (no lane padding of
    # the output).  Exact division so each row sums to 1 within f32 rounding.
    m = jnp.max(logits, axis=-1, keepdims=True)
    e = jnp.exp(logits - m)
    denom = jnp.sum(e, axis=-1, keepdims=True)
    prob_ref[...] = (e / denom).astype(prob_ref.dtype)


@functools.partial(jax.jit, static_argnames=("batch_tile",))
def actor_forward(state, params, batch_tile=1024):
    """Actor forward pass. Returns probs of shape (batch, action_size)."""
    w1, b1, w2, b2, w3, b3 = params
    B, S = state.shape
    A = w3.shape[1]

    if B == 0:  # empty-batch guard (previously divided by zero)
        return jnp.zeros((0, A), jnp.float32)

    # Even batch tiling: cap per-step rows at batch_tile, even out the tiles so
    # tail padding is < 8 rows, and use >= 2 steps for larger batches so both
    # v7x TensorCores get work and DMA overlaps compute.
    n_tiles = _cdiv(B, batch_tile)
    if B >= _SPLIT_THRESHOLD:
        n_tiles = max(n_tiles, 2)
    tile = _round_up(_cdiv(B, n_tiles), _SUBLANE)
    n_tiles = _cdiv(B, tile)
    B_pad = n_tiles * tile
    if B_pad != B:
        state = jnp.pad(state, ((0, B_pad - B), (0, 0)))  # zero rows, sliced away below

    in_specs = [
        pl.BlockSpec((tile, S), lambda i: (i, 0)),   # state tile (pipelined)
        pl.BlockSpec(w1.shape, lambda i: (0, 0)),    # weights/biases: constant index,
        pl.BlockSpec(b1.shape, lambda i: (0, 0)),    # fetched once, VMEM-resident
        pl.BlockSpec(w2.shape, lambda i: (0, 0)),
        pl.BlockSpec(b2.shape, lambda i: (0, 0)),
        pl.BlockSpec(w3.shape, lambda i: (0, 0)),
        pl.BlockSpec(b3.shape, lambda i: (0, 0)),
    ]
    # Output block's last dim equals the full array dim (A), so no lane padding
    # and no wrapper slice over columns.
    out_specs = pl.BlockSpec((tile, A), lambda i: (i, 0))

    prob = pl.pallas_call(
        _actor_kernel,
        out_shape=jax.ShapeDtypeStruct((B_pad, A), jnp.float32),
        grid_spec=pltpu.PrefetchScalarGridSpec(
            num_scalar_prefetch=0,
            grid=(n_tiles,),
            in_specs=in_specs,
            out_specs=out_specs,
        ),
        compiler_params=pltpu.CompilerParams(
            dimension_semantics=("parallel",)),  # v7x: shard batch steps across both TCs
    )(state, w1, b1, w2, b2, w3, b3)

    # TODO(synk): torch.distributions.Categorical has no Pallas equivalent; we
    # return the probability tensor (the distribution's sufficient statistics).
    if B_pad != B:
        prob = prob[:B]
    return prob


def init_actor_params(key, state_size, action_size):
    """PyTorch-nn.Linear-style uniform init.  Weights are stored transposed as
    (in_features, out_features) and pre-cast to bf16 once (hoisted out of the
    hot path); biases stay f32 with shape (1, out_features)."""
    def linear(key, fan_in, fan_out):
        kw, kb = jax.random.split(key)
        bound = 1.0 / jnp.sqrt(fan_in)
        w = jax.random.uniform(kw, (fan_in, fan_out), jnp.float32, -bound, bound)
        b = jax.random.uniform(kb, (1, fan_out), jnp.float32, -bound, bound)
        return w.astype(jnp.bfloat16), b

    k1, k2, k3 = jax.random.split(key, 3)
    w1, b1 = linear(k1, state_size, 32)
    w2, b2 = linear(k2, 32, 64)
    w3, b3 = linear(k3, 64, action_size)
    return (w1, b1, w2, b2, w3, b3)


def actor_forward_ref(state, params):
    """Pure-JAX reference mirroring the kernel's numerics
    (bf16 dot inputs, f32 accumulation / bias / ReLU / softmax)."""
    w1, b1, w2, b2, w3, b3 = params
    x = state.astype(jnp.bfloat16)
    h1 = jnp.maximum(
        jnp.dot(x, w1, preferred_element_type=jnp.float32) + b1, 0.0)
    h2 = jnp.maximum(
        jnp.dot(h1.astype(jnp.bfloat16), w2, preferred_element_type=jnp.float32) + b2, 0.0)
    logits = jnp.dot(h2.astype(jnp.bfloat16), w3,
                     preferred_element_type=jnp.float32) + b3
    return jax.nn.softmax(logits, axis=-1)


if __name__ == "__main__":
    key = jax.random.PRNGKey(0)
    k_params, k_state = jax.random.split(key)

    state_size = 16
    action_size = 8
    batch = 16

    params = init_actor_params(k_params, state_size, action_size)
    state = jax.random.normal(k_state, (batch, state_size), jnp.float32)

    # Single-step grid path (small batch).
    prob = jax.block_until_ready(actor_forward(state, params))
    ref = actor_forward_ref(state, params)
    assert prob.shape == (batch, action_size)
    assert bool(jnp.allclose(jnp.sum(prob, axis=-1), 1.0, atol=1e-3))
    assert bool(jnp.allclose(prob, ref, atol=2e-3, rtol=2e-3))

    # Tail-handling / multi-step grid path (non-multiple batch, tiny tile).
    batch2 = 20
    state2 = jax.random.normal(jax.random.PRNGKey(1), (batch2, state_size),
                               jnp.float32)
    prob2 = jax.block_until_ready(actor_forward(state2, params, batch_tile=8))
    ref2 = actor_forward_ref(state2, params)
    assert prob2.shape == (batch2, action_size)
    assert bool(jnp.allclose(jnp.sum(prob2, axis=-1), 1.0, atol=1e-3))
    assert bool(jnp.allclose(prob2, ref2, atol=2e-3, rtol=2e-3))

    print("KERNEL_OK")
</pallas_src>

<mosaic_0001>
module attributes {stable_mosaic.version = 11 : i64} {
  func.func @_actor_kernel(%arg0: i32, %arg1: memref<16x16xf32, #tpu.memory_space<vmem>>, %arg2: memref<16x32xbf16, #tpu.memory_space<vmem>>, %arg3: memref<1x32xf32, #tpu.memory_space<vmem>>, %arg4: memref<32x64xbf16, #tpu.memory_space<vmem>>, %arg5: memref<1x64xf32, #tpu.memory_space<vmem>>, %arg6: memref<64x8xbf16, #tpu.memory_space<vmem>>, %arg7: memref<1x8xf32, #tpu.memory_space<vmem>>, %arg8: memref<16x8xf32, #tpu.memory_space<vmem>>) attributes {dimension_semantics = [#tpu.dimension_semantics<parallel>], iteration_bounds = array<i64: 1>, scalar_prefetch = 0 : i64, scratch_operands = 0 : i64, tpu.core_type = #tpu.core_type<tc>, window_params = [{transform_indices = @transform_0, window_bounds = array<i64: 16, 16>}, {pipeline_mode = #tpu.pipeline_mode<synchronous>, transform_indices = @transform_1, window_bounds = array<i64: 16, 32>}, {pipeline_mode = #tpu.pipeline_mode<synchronous>, transform_indices = @transform_2, window_bounds = array<i64: 1, 32>}, {pipeline_mode = #tpu.pipeline_mode<synchronous>, transform_indices = @transform_3, window_bounds = array<i64: 32, 64>}, {pipeline_mode = #tpu.pipeline_mode<synchronous>, transform_indices = @transform_4, window_bounds = array<i64: 1, 64>}, {pipeline_mode = #tpu.pipeline_mode<synchronous>, transform_indices = @transform_5, window_bounds = array<i64: 64, 8>}, {pipeline_mode = #tpu.pipeline_mode<synchronous>, transform_indices = @transform_6, window_bounds = array<i64: 1, 8>}, {transform_indices = @transform_7, window_bounds = array<i64: 16, 8>}]} {
    %c0 = arith.constant 0 : index
    %c0_0 = arith.constant 0 : index
    %0 = vector.load %arg1[%c0, %c0_0] : memref<16x16xf32, #tpu.memory_space<vmem>>, vector<16x16xf32>
    %1 = arith.truncf %0 : vector<16x16xf32> to vector<16x16xbf16>
    %c0_1 = arith.constant 0 : index
    %c0_2 = arith.constant 0 : index
    %2 = vector.load %arg2[%c0_1, %c0_2] : memref<16x32xbf16, #tpu.memory_space<vmem>>, vector<16x32xbf16>
    %cst = arith.constant dense<0.000000e+00> : vector<16x32xf32>
    %3 = tpu.matmul %1, %2, %cst {dimension_numbers = #tpu.dot_dimension_numbers<[1], [0], [0], [1], [0, 0, 1, 1], [], []>} : vector<16x16xbf16>, vector<16x32xbf16>, vector<16x32xf32> -> vector<16x32xf32>
    %c0_3 = arith.constant 0 : index
    %c0_4 = arith.constant 0 : index
    %4 = vector.load %arg3[%c0_3, %c0_4] : memref<1x32xf32, #tpu.memory_space<vmem>>, vector<1x32xf32>
    %5 = vector.broadcast %4 : vector<1x32xf32> to vector<16x32xf32>
    %6 = arith.addf %3, %5 : vector<16x32xf32>
    %cst_5 = arith.constant 0.000000e+00 : f32
    %7 = vector.broadcast %cst_5 : f32 to vector<16x32xf32>
    %8 = arith.maximumf %6, %7 : vector<16x32xf32>
    %9 = arith.truncf %8 : vector<16x32xf32> to vector<16x32xbf16>
    %c0_6 = arith.constant 0 : index
    %c0_7 = arith.constant 0 : index
    %10 = vector.load %arg4[%c0_6, %c0_7] : memref<32x64xbf16, #tpu.memory_space<vmem>>, vector<32x64xbf16>
    %cst_8 = arith.constant dense<0.000000e+00> : vector<16x64xf32>
    %11 = tpu.matmul %9, %10, %cst_8 {dimension_numbers = #tpu.dot_dimension_numbers<[1], [0], [0], [1], [0, 0, 1, 1], [], []>} : vector<16x32xbf16>, vector<32x64xbf16>, vector<16x64xf32> -> vector<16x64xf32>
    %c0_9 = arith.constant 0 : index
    %c0_10 = arith.constant 0 : index
    %12 = vector.load %arg5[%c0_9, %c0_10] : memref<1x64xf32, #tpu.memory_space<vmem>>, vector<1x64xf32>
    %13 = vector.broadcast %12 : vector<1x64xf32> to vector<16x64xf32>
    %14 = arith.addf %11, %13 : vector<16x64xf32>
    %cst_11 = arith.constant 0.000000e+00 : f32
    %15 = vector.broadcast %cst_11 : f32 to vector<16x64xf32>
    %16 = arith.maximumf %14, %15 : vector<16x64xf32>
    %17 = arith.truncf %16 : vector<16x64xf32> to vector<16x64xbf16>
    %c0_12 = arith.constant 0 : index
    %c0_13 = arith.constant 0 : index
    %18 = vector.load %arg6[%c0_12, %c0_13] : memref<64x8xbf16, #tpu.memory_space<vmem>>, vector<64x8xbf16>
    %cst_14 = arith.constant dense<0.000000e+00> : vector<16x8xf32>
    %19 = tpu.matmul %17, %18, %cst_14 {dimension_numbers = #tpu.dot_dimension_numbers<[1], [0], [0], [1], [0, 0, 1, 1], [], []>} : vector<16x64xbf16>, vector<64x8xbf16>, vector<16x8xf32> -> vector<16x8xf32>
    %c0_15 = arith.constant 0 : index
    %c0_16 = arith.constant 0 : index
    %20 = vector.load %arg7[%c0_15, %c0_16] : memref<1x8xf32, #tpu.memory_space<vmem>>, vector<1x8xf32>
    %21 = vector.broadcast %20 : vector<1x8xf32> to vector<16x8xf32>
    %22 = arith.addf %19, %21 : vector<16x8xf32>
    %cst_17 = arith.constant dense<0xFF800000> : vector<16xf32>
    %23 = vector.multi_reduction <maximumf>, %22, %cst_17 [1] : vector<16x8xf32> to vector<16xf32>
    %24 = vector.shape_cast %23 : vector<16xf32> to vector<16x1xf32>
    %25 = vector.broadcast %24 : vector<16x1xf32> to vector<16x8xf32>
    %26 = arith.subf %22, %25 : vector<16x8xf32>
    %27 = math.exp %26 : vector<16x8xf32>
    %cst_18 = arith.constant dense<0.000000e+00> : vector<16xf32>
    %28 = vector.multi_reduction <add>, %27, %cst_18 [1] : vector<16x8xf32> to vector<16xf32>
    %29 = vector.shape_cast %28 : vector<16xf32> to vector<16x1xf32>
    %30 = vector.broadcast %29 : vector<16x1xf32> to vector<16x8xf32>
    %31 = arith.divf %27, %30 : vector<16x8xf32>
    %c0_19 = arith.constant 0 : index
    %c0_20 = arith.constant 0 : index
    %32 = vector.load %arg8[%c0_19, %c0_20] : memref<16x8xf32, #tpu.memory_space<vmem>>, vector<16x8xf32>
    tpu.vector_store %arg8[%c0_19, %c0_20], %31 {strides = array<i32>} : memref<16x8xf32, #tpu.memory_space<vmem>>, vector<16x8xf32>,
    return
  }
  func.func @transform_0(%arg0: i32) -> (i32, i32) {
    %c0_i32 = arith.constant 0 : i32
    %c0_i32_0 = arith.constant 0 : i32
    return %arg0, %c0_i32 : i32, i32
  }
  func.func @transform_1(%arg0: i32) -> (i32, i32) {
    %c0_i32 = arith.constant 0 : i32
    %c0_i32_0 = arith.constant 0 : i32
    %c0_i32_1 = arith.constant 0 : i32
    return %c0_i32, %c0_i32_0 : i32, i32
  }
  func.func @transform_2(%arg0: i32) -> (i32, i32) {
    %c0_i32 = arith.constant 0 : i32
    %c0_i32_0 = arith.constant 0 : i32
    %c0_i32_1 = arith.constant 0 : i32
    return %c0_i32, %c0_i32_0 : i32, i32
  }
  func.func @transform_3(%arg0: i32) -> (i32, i32) {
    %c0_i32 = arith.constant 0 : i32
    %c0_i32_0 = arith.constant 0 : i32
    %c0_i32_1 = arith.constant 0 : i32
    return %c0_i32, %c0_i32_0 : i32, i32
  }
  func.func @transform_4(%arg0: i32) -> (i32, i32) {
    %c0_i32 = arith.constant 0 : i32
    %c0_i32_0 = arith.constant 0 : i32
    %c0_i32_1 = arith.constant 0 : i32
    return %c0_i32, %c0_i32_0 : i32, i32
  }
  func.func @transform_5(%arg0: i32) -> (i32, i32) {
    %c0_i32 = arith.constant 0 : i32
    %c0_i32_0 = arith.constant 0 : i32
    %c0_i32_1 = arith.constant 0 : i32
    return %c0_i32, %c0_i32_0 : i32, i32
  }
  func.func @transform_6(%arg0: i32) -> (i32, i32) {
    %c0_i32 = arith.constant 0 : i32
    %c0_i32_0 = arith.constant 0 : i32
    %c0_i32_1 = arith.constant 0 : i32
    return %c0_i32, %c0_i32_0 : i32, i32
  }
  func.func @transform_7(%arg0: i32) -> (i32, i32) {
    %c0_i32 = arith.constant 0 : i32
    %c0_i32_0 = arith.constant 0 : i32
    return %arg0, %c0_i32 : i32, i32
  }
}

</mosaic_0001>

<llo_original>
// kernel: actor_forward.1
$region0: #{actor_forward.1}
  #allocation0 [shape = 'u32[]', space=smem, size = 0x4, offset = 0x4, fixed_abs, tag = 'smem constant byte address 0x4 - core index']
  #allocation1 [shape = 'u32[144,128]{1,0:T(1,128)}', space=vmem, size = 0x12000, scoped, tag = 'internal scratch']
  %s0 = inlined_call_operand.vmem [shape: f32[16,16], index: 0, kind: input, shape index: {}]
  %s1 = inlined_call_operand.hbm [shape: bf16[16,32], index: 1, kind: input, shape index: {}]
  %s2 = inlined_call_operand.vmem [shape: f32[1,32], index: 2, kind: input, shape index: {}]
  %s3 = inlined_call_operand.vmem [shape: bf16[32,64], index: 3, kind: input, shape index: {}]
  %s4 = inlined_call_operand.vmem [shape: f32[1,64], index: 4, kind: input, shape index: {}]
  %s5 = inlined_call_operand.vmem [shape: bf16[64,8], index: 5, kind: input, shape index: {}]
  %s6 = inlined_call_operand.vmem [shape: f32[1,8], index: 6, kind: input, shape index: {}]
  %s7 = inlined_call_operand.vmem [shape: f32[16,8], index: 7, kind: output, shape index: {}]
  %s8 = sld [smem:[#allocation0]]
  $region42: #{actor_forward.1} parent=0
    _
  %s10 = ssub.s32 1, %s8
  %s11 = scalar_select 0, %s10, %s8
  $region1: #{actor_forward.1} parent=0
    #allocation2 [shape = 'u8[4096]{0}', space=vmem, size = 0x1000, scoped, tag = 'input window, operand 1, single buffered']
    #allocation3 [shape = 's32[1]{0}', space=sflag, size = 0x4, scoped, tag = 'scoped memory for actor_forward.1']
    %12 = vsyncpa [#allocation3], 0
    // Predicated region
    $region2: #{actor_forward.1} parent=1 // pred_check
      _
    $region3: #{actor_forward.1} parent=1 // pred_check_branch
      %14 = sbr.rel (0) target = $region5
    $region4: #{actor_forward.1} parent=1 // pred_region
      _
    $region5: #{actor_forward.1} parent=1 // pred_fallthru
      _
    // Predicated region
    $region6: #{actor_forward.1} parent=1 // pred_check
      _
    $region7: #{actor_forward.1} parent=1 // pred_check_branch
      %16 = sbr.rel (0) target = $region9
    $region8: #{actor_forward.1} parent=1 // pred_region
      %s18 = ssub.s32 128, 128
      %19 = vsyncadd [#allocation3], %s18
      %s20 = sshll.u32 [#allocation2], 4
      %s21 = int_to_ptr.vmem [resolvable:$true] %s20
      %26 = dma.hbm_to_vmem [thread:$0]  %s1, 128, %s21, [#allocation3], 64, 64, 4
    $region9: #{actor_forward.1} parent=1 // pred_fallthru
      _
    // Predicated region
    $region10: #{actor_forward.1} parent=1 // pred_check
      _
    $region11: #{actor_forward.1} parent=1 // pred_check_branch
      %28 = sbr.rel (0) target = $region13
    $region12: #{actor_forward.1} parent=1 // pred_region
      _
    $region13: #{actor_forward.1} parent=1 // pred_fallthru
      _
    // Predicated region
    $region14: #{actor_forward.1} parent=1 // pred_check
      _
    $region15: #{actor_forward.1} parent=1 // pred_check_branch
      %30 = sbr.rel (0) target = $region17
    $region16: #{actor_forward.1} parent=1 // pred_region
      _
    $region17: #{actor_forward.1} parent=1 // pred_fallthru
      _
    // Predicated region
    $region18: #{actor_forward.1} parent=1 // pred_check
      _
    $region19: #{actor_forward.1} parent=1 // pred_check_branch
      %32 = sbr.rel (0) target = $region21
    $region20: #{actor_forward.1} parent=1 // pred_region
      _
    $region21: #{actor_forward.1} parent=1 // pred_fallthru
      _
    // Predicated region
    $region22: #{actor_forward.1} parent=1 // pred_check
      _
    $region23: #{actor_forward.1} parent=1 // pred_check_branch
      %34 = sbr.rel (0) target = $region25
    $region24: #{actor_forward.1} parent=1 // pred_region
      _
    $region25: #{actor_forward.1} parent=1 // pred_fallthru
      _
    // Predicated region
    $region26: #{actor_forward.1} parent=1 // pred_check
      _
    $region27: #{actor_forward.1} parent=1 // pred_check_branch
      %36 = sbr.rel (0) target = $region29
    $region28: #{actor_forward.1} parent=1 // pred_region
      _
    $region29: #{actor_forward.1} parent=1 // pred_fallthru
      _
    // Predicated region
    $region30: #{actor_forward.1} parent=1 // pred_check
      _
    $region31: #{actor_forward.1} parent=1 // pred_check_branch
      %38 = sbr.rel (0) target = $region33
    $region32: #{actor_forward.1} parent=1 // pred_region
      %39 = dma.done [#allocation3], 128
    $region33: #{actor_forward.1} parent=1 // pred_fallthru
      _
    %v41 = vld [vmem:[%s0] sm:$0xff]
    %v42 = vld [vmem:[%s0 + $0x8] sm:$0xff]
    %v43 = vpack.c.bf16 %v42, %v41
    %v44 = vld [vmem:[#allocation2] sm:$0xf]
    %v45 = vld [vmem:[#allocation2 + $0x4] sm:$0xf]
    %v46 = vld [vmem:[%s2] sm:$0x1]
    %v48 = vlaneseq
    %v49 = vshrl.u32 %v48, 7
    %v50 = vsub.s32 0, %v49
    %v51 = vrot.slane %v46, %v50
    %v55 = vunpack.c.l.b16 %v44
    %v56 = vunpack.c.l.b16 %v45
    %v57 = vpack.c.b16 %v56, %v55
    %vm59 = vcmask 130048
    %v61 = vsel %vm59, %v43, 0
    %63 = vmatprep.subr.bf16.mxu0 0
    %64 = vmatpush1.bf16.msra.mxu0 0
    %65 = vmatprep.subr.bf16.mxu0 0
    %66 = vmatpush1.bf16.msra.mxu0 0
    %67 = vmatprep.subr.bf16.mxu0 0
    %68 = vmatpush1.bf16.msra.mxu0 0
    %69 = vmatprep.subr.bf16.mxu0 0
    %70 = vmatpush1.bf16.msra.mxu0 0
    %71 = vmatprep.subr.bf16.mxu0 0
    %72 = vmatpush1.bf16.msra.mxu0 0
    %73 = vmatprep.subr.bf16.mxu0 0
    %74 = vmatpush1.bf16.msra.mxu0 0
    %75 = vmatprep.subr.bf16.mxu0 0
    %76 = vmatpush1.bf16.msra.mxu0 0
    %77 = vmatprep.subr.bf16.mxu0 0
    %78 = vmatpush1.bf16.msra.mxu0 %v57
    %79 = vmatprep.subr.bf16.mxu0 0
    %80 = vmatpush2.bf16.msra.mxu0 0
    %81 = vmatprep.subr.bf16.mxu0 0
    %82 = vmatpush2.bf16.msra.mxu0 0
    %83 = vmatprep.subr.bf16.mxu0 0
    %84 = vmatpush2.bf16.msra.mxu0 0
    %85 = vmatprep.subr.bf16.mxu0 0
    %86 = vmatpush2.bf16.msra.mxu0 0
    %87 = vmatprep.subr.bf16.mxu0 0
    %88 = vmatpush2.bf16.msra.mxu0 0
    %89 = vmatprep.subr.bf16.mxu0 0
    %90 = vmatpush2.bf16.msra.mxu0 0
    %91 = vmatprep.subr.bf16.mxu0 0
    %92 = vmatpush2.bf16.msra.mxu0 0
    %93 = vmatprep.subr.bf16.mxu0 0
    %94 = vmatpush2.bf16.msra.mxu0 0
    %95 = vmatprep.mubr.bf16.mxu0 0
    %96 = vmatmul.mubr.bf16.gmra.mxu0 %v61
    %v97 = vpop.f32.mrf.mxu0
    %v98 = vadd.f32 %v51, %v97
    %v99 = vpop.f32.mrf.mxu0
    %v100 = vpop.f32.mrf.mxu0
    %v101 = vadd.f32 %v51, %v100
    %v102 = vpop.f32.mrf.mxu0
    %103 = vdwg.mxu0
    %v104 = vmax.f32 %v98, 0.0
    %v105 = vmax.f32 %v101, 0.0
    %v106 = vpack.c.bf16 %v105, %v104
    %v107 = vld [vmem:[%s3] sm:$0xf]
    %v108 = vld [vmem:[%s3 + $0x4] sm:$0xf]
    %v109 = vld [vmem:[%s3 + $0x8] sm:$0xf]
    %v110 = vld [vmem:[%s3 + $0xc] sm:$0xf]
    %v111 = vld [vmem:[%s4] sm:$0x1]
    %v113 = vlaneseq
    %v114 = vshrl.u32 %v113, 7
    %v115 = vsub.s32 0, %v114
    %v116 = vrot.slane %v111, %v115
    %v122 = vunpack.c.l.b16 %v107
    %v123 = vunpack.c.l.b16 %v108
    %v124 = vunpack.c.l.b16 %v109
    %v125 = vunpack.c.l.b16 %v110
    %v126 = vpack.c.b16 %v123, %v122
    %v127 = vpack.c.b16 %v125, %v124
    %vm130 = vcmask 261120
    %v132 = vsel %vm130, %v106, 0
    %134 = vmatprep.subr.bf16.mxu0 0
    %135 = vmatpush1.bf16.msra.mxu0 0
    %136 = vmatprep.subr.bf16.mxu0 0
    %137 = vmatpush1.bf16.msra.mxu0 0
    %138 = vmatprep.subr.bf16.mxu0 0
    %139 = vmatpush1.bf16.msra.mxu0 0
    %140 = vmatprep.subr.bf16.mxu0 0
    %141 = vmatpush1.bf16.msra.mxu0 0
    %142 = vmatprep.subr.bf16.mxu0 0
    %143 = vmatpush1.bf16.msra.mxu0 0
    %144 = vmatprep.subr.bf16.mxu0 0
    %145 = vmatpush1.bf16.msra.mxu0 0
    %146 = vmatprep.subr.bf16.mxu0 0
    %147 = vmatpush1.bf16.msra.mxu0 %v127
    %148 = vmatprep.subr.bf16.mxu0 0
    %149 = vmatpush1.bf16.msra.mxu0 %v126
    %150 = vmatprep.subr.bf16.mxu0 0
    %151 = vmatpush2.bf16.msra.mxu0 0
    %152 = vmatprep.subr.bf16.mxu0 0
    %153 = vmatpush2.bf16.msra.mxu0 0
    %154 = vmatprep.subr.bf16.mxu0 0
    %155 = vmatpush2.bf16.msra.mxu0 0
    %156 = vmatprep.subr.bf16.mxu0 0
    %157 = vmatpush2.bf16.msra.mxu0 0
    %158 = vmatprep.subr.bf16.mxu0 0
    %159 = vmatpush2.bf16.msra.mxu0 0
    %160 = vmatprep.subr.bf16.mxu0 0
    %161 = vmatpush2.bf16.msra.mxu0 0
    %162 = vmatprep.subr.bf16.mxu0 0
    %163 = vmatpush2.bf16.msra.mxu0 0
    %164 = vmatprep.subr.bf16.mxu0 0
    %165 = vmatpush2.bf16.msra.mxu0 0
    %166 = vmatprep.mubr.bf16.mxu0 0
    %167 = vmatmul.mubr.bf16.gmra.mxu0 %v132
    %v168 = vpop.f32.mrf.mxu0
    %v169 = vadd.f32 %v116, %v168
    %v170 = vpop.f32.mrf.mxu0
    %v171 = vpop.f32.mrf.mxu0
    %v172 = vadd.f32 %v116, %v171
    %v173 = vpop.f32.mrf.mxu0
    %174 = vdwg.mxu0
    %v175 = vmax.f32 %v169, 0.0
    %v176 = vmax.f32 %v172, 0.0
    %v177 = vpack.c.bf16 %v176, %v175
    %v178 = vld [vmem:[%s5] sm:$0xf]
    %v179 = vld [vmem:[%s5 + $0x4] sm:$0xf]
    %v180 = vld [vmem:[%s5 + $0x8] sm:$0xf]
    %v181 = vld [vmem:[%s5 + $0xc] sm:$0xf]
    %v182 = vld [vmem:[%s5 + $0x10] sm:$0xf]
    %v183 = vld [vmem:[%s5 + $0x14] sm:$0xf]
    %v184 = vld [vmem:[%s5 + $0x18] sm:$0xf]
    %v185 = vld [vmem:[%s5 + $0x1c] sm:$0xf]
    %v186 = vld [vmem:[%s6] sm:$0x1]
    %v188 = vlaneseq
    %v189 = vshrl.u32 %v188, 7
    %v190 = vsub.s32 0, %v189
    %v191 = vrot.slane %v186, %v190
    %v201 = vunpack.c.l.b16 %v178
    %v202 = vunpack.c.l.b16 %v179
    %v203 = vunpack.c.l.b16 %v180
    %v204 = vunpack.c.l.b16 %v181
    %v205 = vunpack.c.l.b16 %v182
    %v206 = vunpack.c.l.b16 %v183
    %v207 = vunpack.c.l.b16 %v184
    %v208 = vunpack.c.l.b16 %v185
    %v209 = vpack.c.b16 %v202, %v201
    %v210 = vpack.c.b16 %v204, %v203
    %v211 = vpack.c.b16 %v206, %v205
    %v212 = vpack.c.b16 %v208, %v207
    %vm217 = vcmask 523264
    %v219 = vsel %vm217, %v177, 0
    %221 = vmatprep.subr.bf16.mxu0 0
    %222 = vmatpush1.bf16.msra.mxu0 0
    %223 = vmatprep.subr.bf16.mxu0 0
    %224 = vmatpush1.bf16.msra.mxu0 0
    %225 = vmatprep.subr.bf16.mxu0 0
    %226 = vmatpush1.bf16.msra.mxu0 0
    %227 = vmatprep.subr.bf16.mxu0 0
    %228 = vmatpush1.bf16.msra.mxu0 0
    %229 = vmatprep.subr.bf16.mxu0 0
    %230 = vmatpush1.bf16.msra.mxu0 %v212
    %231 = vmatprep.subr.bf16.mxu0 0
    %232 = vmatpush1.bf16.msra.mxu0 %v211
    %233 = vmatprep.subr.bf16.mxu0 0
    %234 = vmatpush1.bf16.msra.mxu0 %v210
    %235 = vmatprep.subr.bf16.mxu0 0
    %236 = vmatpush1.bf16.msra.mxu0 %v209
    %237 = vmatprep.subr.bf16.mxu0 0
    %238 = vmatpush2.bf16.msra.mxu0 0
    %239 = vmatprep.subr.bf16.mxu0 0
    %240 = vmatpush2.bf16.msra.mxu0 0
    %241 = vmatprep.subr.bf16.mxu0 0
    %242 = vmatpush2.bf16.msra.mxu0 0
    %243 = vmatprep.subr.bf16.mxu0 0
    %244 = vmatpush2.bf16.msra.mxu0 0
    %245 = vmatprep.subr.bf16.mxu0 0
    %246 = vmatpush2.bf16.msra.mxu0 0
    %247 = vmatprep.subr.bf16.mxu0 0
    %248 = vmatpush2.bf16.msra.mxu0 0
    %249 = vmatprep.subr.bf16.mxu0 0
    %250 = vmatpush2.bf16.msra.mxu0 0
    %251 = vmatprep.subr.bf16.mxu0 0
    %252 = vmatpush2.bf16.msra.mxu0 0
    %253 = vmatprep.mubr.bf16.mxu0 0
    %254 = vmatmul.mubr.bf16.gmra.mxu0 %v219
    %v255 = vpop.f32.mrf.mxu0
    %v256 = vadd.f32 %v191, %v255
    %v257 = vpop.f32.mrf.mxu0
    %v258 = vpop.f32.mrf.mxu0
    %v259 = vadd.f32 %v191, %v258
    %v260 = vpop.f32.mrf.mxu0
    %261 = vdwg.mxu0
    %vm262 = vcmask 64512
    %v263 = vsel %vm262, %v256, -inf
    %264 = vmax.xlane.f32.xlu0 %v263
    %v265 = vpop.xlane.xlu0 %264
    %v266 = vsel %vm262, %v259, -inf
    %267 = vmax.xlane.f32.xlu0 %v266
    %v268 = vpop.xlane.xlu0 %267
    %v269 = vsub.f32 %v256, %v265
    %v270 = vsub.f32 %v259, %v268
    %v271 = vmul.f32 %v269, 1.442695
    %v272 = vpow.pop %v271
    %v273 = vmul.f32 %v270, 1.442695
    %v274 = vpow.pop %v273
    %v275 = vsel %vm262, %v272, 0.0
    %276 = vadd.xlane.f32.xlu0 %v275
    %v277 = vpop.xlane.xlu0 %276
    %v278 = vsel %vm262, %v274, 0.0
    %279 = vadd.xlane.f32.xlu0 %v278
    %v280 = vpop.xlane.xlu0 %279
    %v281 = vrcp.pop %v277
    %v282 = vmul.f32 %v272, %v281
    %v283 = vrcp.pop %v280
    %v284 = vmul.f32 %v274, %v283
    %285 = vst.msk [vmem:[%s7] sm:$0xff] %vm262, %v282
    %286 = vst.msk [vmem:[%s7 + $0x8] sm:$0xff] %vm262, %v284
    // Predicated region
    $region34: #{actor_forward.1} parent=1 // pred_check
      _
    $region35: #{actor_forward.1} parent=1 // pred_check_branch
      %288 = sbr.rel (0) target = $region37
    $region36: #{actor_forward.1} parent=1 // pred_region
      _
    $region37: #{actor_forward.1} parent=1 // pred_fallthru
      _
    // Predicated region
    $region38: #{actor_forward.1} parent=1 // pred_check
      _
    $region39: #{actor_forward.1} parent=1 // pred_check_branch
      %290 = sbr.rel (0) target = $region41
    $region40: #{actor_forward.1} parent=1 // pred_region
      _
    $region41: #{actor_forward.1} parent=1 // pred_fallthru
      _
    %291 = vsyncpa [#allocation3], 1

</llo_original>
